<compile_context>
chip_gen: v7x
topology: tpu7x:2x2x1
jax: 0.10.0
libtpu: 0.0.40
codegen_flags: <defaults>
</compile_context>

<pallas_src>
import jax
import jax.numpy as jnp
from jax.experimental import pallas as pl
from jax.experimental.pallas import tpu as pltpu


_NEG_PAD = -1e30                                   # finite: exp() underflows to 0
_F32_LOWEST = float(jnp.finfo(jnp.float32).min)    # safe running-max init


def soft_label_loss_kernel(pred_ref, tgt_ref, out_ref,
                           m_ref, se_ref, ts_ref, tx_ref):
    i = pl.program_id(1)              # batch-tile step   ("arbitrary")
    j = pl.program_id(2)              # class-chunk step  ("arbitrary", innermost)
    nj = pl.num_programs(2)

    @pl.when((i == 0) & (j == 0))
    def _init_core():                 # this core's scalar partial (output-resident)
        out_ref[...] = jnp.zeros_like(out_ref)

    @pl.when(j == 0)
    def _init_rows():                 # per-row online-LSE state
        m_ref[...] = jnp.full(m_ref.shape, _F32_LOWEST, jnp.float32)
        se_ref[...] = jnp.zeros_like(se_ref)
        ts_ref[...] = jnp.zeros_like(ts_ref)
        tx_ref[...] = jnp.zeros_like(tx_ref)

    # Single sweep: each element is loaded from VMEM and cast to f32 exactly once.
    x = pred_ref[...].astype(jnp.float32)            # (tb, tc)
    t = tgt_ref[...].astype(jnp.float32)             # (tb, tc)

    m_prev = m_ref[...]                              # (tb, 1)
    m_new = jnp.maximum(m_prev, jnp.max(x, axis=-1, keepdims=True))
    e = jnp.exp(x - m_new)                           # EUP slot

    # Row reductions on the otherwise-idle MXU (dot with a ones vector) keep the
    # accumulate-adds off the VALU slot, which otherwise binds on v7x.
    ones = jnp.ones((x.shape[-1], 1), jnp.float32)
    se_blk = jnp.dot(e, ones, preferred_element_type=jnp.float32)      # (tb, 1)
    ts_blk = jnp.dot(t, ones, preferred_element_type=jnp.float32)      # (tb, 1)
    tx_blk = jnp.dot(t * x, ones, preferred_element_type=jnp.float32)  # (tb, 1)

    alpha = jnp.exp(m_prev - m_new)                  # rescale old sum-exp (<= 1)
    se_ref[...] = alpha * se_ref[...] + se_blk
    ts_ref[...] = ts_ref[...] + ts_blk
    tx_ref[...] = tx_ref[...] + tx_blk
    m_ref[...] = m_new

    @pl.when(j == nj - 1)
    def _finish_rows():
        # row_loss = -sum(t * log_softmax(x)) = lse * sum(t) - sum(t * x)
        lse = jnp.log(se_ref[...]) + m_ref[...]                    # (tb, 1)
        row_loss = lse * ts_ref[...] - tx_ref[...]                 # (tb, 1)
        out_ref[...] += jnp.sum(row_loss, keepdims=True)[None]     # (1, 1, 1)


def _round_up(x, m):
    return ((x + m - 1) // m) * m


def _pick_tiles(B, C, pred_isz, tgt_isz, vmem_limit, tb, tc):
    # Lane-dense class chunk: whole row when small, else a 128-multiple chunk.
    if tc is None:
        tc = C if C <= 2048 else 2048
    if tb is None:
        # VMEM per grid step:
        #   raw blocks:  2 inputs x 2 pipeline buffers  -> 2*(szp+szt) bytes/elem
        #   f32 temporaries (x, t, e, t*x, slack)       -> ~5*4 bytes/elem
        # keep total under ~60% of the limit; cap each raw input block at 4 MiB.
        per_elem = 2 * (pred_isz + tgt_isz) + 5 * 4
        budget = (vmem_limit * 3) // 5
        cap = budget // (tc * per_elem)
        cap = min(cap, (4 << 20) // (tc * max(pred_isz, tgt_isz)))
        cap = min(cap, _round_up(pl.cdiv(B, 2), 8))   # >= 2 tiles when possible
        cap = max(8, (cap // 8) * 8)
        tb = cap
        # Prefer a nearby tile that splits B into an even number of whole tiles
        # (no padding copy, both v7x TensorCores busy).
        if B % 16 == 0:
            d = cap
            while d >= 8 and 4 * d >= cap:
                if B % (2 * d) == 0:
                    tb = d
                    break
                d -= 8
    return tb, tc


def soft_label_loss(pred, target, *, tb=None, tc=None):
    """Pallas implementation of SoftLabelLoss.forward (dim=-1).

    pred/target: [B, C]; f32 or bf16 (bf16 halves HBM traffic; math is f32).
    """
    assert pred.ndim == 2 and pred.shape == target.shape
    B, C = pred.shape

    # Per-generation VMEM limit: ~3/4 of physical (~96 MiB v5e/v6e, ~48 MiB v7x).
    try:
        vmem_cap = int(pltpu.get_tpu_info().vmem_capacity_bytes)
    except Exception:
        vmem_cap = 64 << 20                       # conservative (v7x-sized) fallback
    vmem_limit = max(32 << 20, (vmem_cap * 3) // 4)

    tb, tc = _pick_tiles(B, C,
                         jnp.dtype(pred.dtype).itemsize,
                         jnp.dtype(target.dtype).itemsize,
                         vmem_limit, tb, tc)
    assert tb > 0 and tb % 8 == 0

    # Grid geometry: both TensorCores get work whenever there are >= 2 batch
    # tiles (the extra axis is a harmless sequential loop on 1-TC v5e/v6e).
    total_steps = pl.cdiv(B, tb)
    ncores = 2 if total_steps >= 2 else 1
    bsteps = pl.cdiv(total_steps, ncores)
    B_pad = ncores * bsteps * tb
    C_pad = _round_up(C, tc)
    csteps = C_pad // tc
    assert tc == C_pad or tc % 128 == 0, "class chunk must be lane-dense"

    # Pad only when needed.  target pad = 0 -> padded rows/cols contribute 0;
    # pred pad = large finite negative -> exp underflows to 0 (never 0 * inf).
    # TODO(synk): clamp-aware in-kernel tail masking would avoid this pad copy
    # for awkward batch sizes.
    if B_pad != B or C_pad != C:
        pred = jnp.pad(pred, ((0, B_pad - B), (0, C_pad - C)),
                       constant_values=_NEG_PAD)
        target = jnp.pad(target, ((0, B_pad - B), (0, C_pad - C)),
                         constant_values=0)

    partials = pl.pallas_call(
        soft_label_loss_kernel,
        out_shape=jax.ShapeDtypeStruct((ncores, 1, 1), jnp.float32),
        grid_spec=pltpu.PrefetchScalarGridSpec(
            num_scalar_prefetch=0,
            grid=(ncores, bsteps, csteps),
            in_specs=[
                pl.BlockSpec((tb, tc), lambda c, i, j: (c * bsteps + i, j)),
                pl.BlockSpec((tb, tc), lambda c, i, j: (c * bsteps + i, j)),
            ],
            out_specs=pl.BlockSpec((1, 1, 1), lambda c, i, j: (c, 0, 0)),
            scratch_shapes=[pltpu.VMEM((tb, 1), jnp.float32)] * 4,
        ),
        compiler_params=pltpu.CompilerParams(
            dimension_semantics=("parallel", "arbitrary", "arbitrary"),
            vmem_limit_bytes=int(vmem_limit),
        ),
    )(pred, target)

    # Per-core partials -> batch mean (divide by the ORIGINAL batch size).
    return jnp.sum(partials) / B


def soft_label_loss_ref(pred, target):
    logp = jax.nn.log_softmax(pred.astype(jnp.float32), axis=-1)
    return jnp.mean(jnp.sum(-target.astype(jnp.float32) * logp, axis=-1))


if __name__ == "__main__":
    key = jax.random.PRNGKey(0)
    ks = jax.random.split(key, 8)

    def make(kp, kt, B, C, dtype=jnp.float32):
        p = jax.random.normal(kp, (B, C), dtype=jnp.float32)
        t = jax.nn.softmax(jax.random.normal(kt, (B, C), dtype=jnp.float32), -1)
        return p.astype(dtype), t.astype(dtype)

    # f32 row-sums ride the MXU; tolerance also covers possible reduced-precision
    # MXU passes at default matmul precision (loss magnitude is O(log C) ~ 3.5).
    TOL = dict(atol=3e-3, rtol=3e-3)

    # 1) small f32 case matching the module (single tile, single core)
    p, t = make(ks[0], ks[1], 8, 32)
    out = jax.block_until_ready(soft_label_loss(p, t))
    ref = soft_label_loss_ref(p, t)
    assert jnp.allclose(out, ref, **TOL), (out, ref)

    # 2) non-8-aligned batch -> padded rows, 2-way core axis
    p, t = make(ks[2], ks[3], 10, 40)
    out = jax.block_until_ready(soft_label_loss(p, t))
    ref = soft_label_loss_ref(p, t)
    assert jnp.allclose(out, ref, **TOL), (out, ref)

    # 3) bf16 inputs, odd tile count (pads 8 rows), 2-way core axis
    p, t = make(ks[4], ks[5], 24, 128, jnp.bfloat16)
    out = jax.block_until_ready(soft_label_loss(p, t, tb=8))
    ref = soft_label_loss_ref(p, t)
    assert jnp.allclose(out, ref, **TOL), (out, ref)

    # 4) class-chunked online logsumexp with a padded class tail
    p, t = make(ks[6], ks[7], 16, 300)
    out = jax.block_until_ready(soft_label_loss(p, t, tb=8, tc=128))
    ref = soft_label_loss_ref(p, t)
    assert jnp.allclose(out, ref, **TOL), (out, ref)

    print("KERNEL_OK")
</pallas_src>

<mosaic_0001>
module attributes {stable_mosaic.version = 11 : i64} {
  func.func @soft_label_loss_kernel(%arg0: i32, %arg1: i32, %arg2: i32, %arg3: memref<8x32xf32, #tpu.memory_space<vmem>>, %arg4: memref<8x32xf32, #tpu.memory_space<vmem>>, %arg5: memref<1x1x1xf32, #tpu.memory_space<vmem>>, %arg6: memref<8x1xf32, #tpu.memory_space<vmem>>, %arg7: memref<8x1xf32, #tpu.memory_space<vmem>>, %arg8: memref<8x1xf32, #tpu.memory_space<vmem>>, %arg9: memref<8x1xf32, #tpu.memory_space<vmem>>) attributes {dimension_semantics = [#tpu.dimension_semantics<parallel>, #tpu.dimension_semantics<arbitrary>, #tpu.dimension_semantics<arbitrary>], iteration_bounds = array<i64: 1, 1, 1>, scalar_prefetch = 0 : i64, scratch_operands = 4 : i64, tpu.core_type = #tpu.core_type<tc>, window_params = [{transform_indices = @transform_0, window_bounds = array<i64: 8, 32>}, {transform_indices = @transform_1, window_bounds = array<i64: 8, 32>}, {transform_indices = @transform_2, window_bounds = array<i64: 1, 1, 1>}]} {
    %c0_i32 = arith.constant 0 : i32
    %0 = arith.cmpi eq, %arg1, %c0_i32 : i32
    %c0_i32_0 = arith.constant 0 : i32
    %1 = arith.cmpi eq, %arg2, %c0_i32_0 : i32
    %2 = arith.andi %0, %1 : i1
    %3 = arith.extui %2 : i1 to i32
    %c0_i32_1 = arith.constant 0 : i32
    %4 = arith.cmpi ne, %3, %c0_i32_1 : i32
    scf.if %4 {
      %cst_29 = arith.constant 0.000000e+00 : f32
      %38 = vector.broadcast %cst_29 : f32 to vector<1x1x1xf32>
      %c0_30 = arith.constant 0 : index
      %c0_31 = arith.constant 0 : index
      %c0_32 = arith.constant 0 : index
      %39 = vector.load %arg5[%c0_30, %c0_31, %c0_32] : memref<1x1x1xf32, #tpu.memory_space<vmem>>, vector<1x1x1xf32>
      tpu.vector_store %arg5[%c0_30, %c0_31, %c0_32], %38 {strides = array<i32>} : memref<1x1x1xf32, #tpu.memory_space<vmem>>, vector<1x1x1xf32>,
    } else {
    }
    %c0_i32_2 = arith.constant 0 : i32
    %5 = arith.cmpi eq, %arg2, %c0_i32_2 : i32
    %6 = arith.extui %5 : i1 to i32
    %c0_i32_3 = arith.constant 0 : i32
    %7 = arith.cmpi ne, %6, %c0_i32_3 : i32
    scf.if %7 {
      %cst_29 = arith.constant -3.40282347E+38 : f32
      %38 = vector.broadcast %cst_29 : f32 to vector<8x1xf32>
      %c0_30 = arith.constant 0 : index
      %c0_31 = arith.constant 0 : index
      %39 = vector.load %arg6[%c0_30, %c0_31] : memref<8x1xf32, #tpu.memory_space<vmem>>, vector<8x1xf32>
      tpu.vector_store %arg6[%c0_30, %c0_31], %38 {strides = array<i32>} : memref<8x1xf32, #tpu.memory_space<vmem>>, vector<8x1xf32>,
      %cst_32 = arith.constant 0.000000e+00 : f32
      %40 = vector.broadcast %cst_32 : f32 to vector<8x1xf32>
      %c0_33 = arith.constant 0 : index
      %c0_34 = arith.constant 0 : index
      %41 = vector.load %arg7[%c0_33, %c0_34] : memref<8x1xf32, #tpu.memory_space<vmem>>, vector<8x1xf32>
      tpu.vector_store %arg7[%c0_33, %c0_34], %40 {strides = array<i32>} : memref<8x1xf32, #tpu.memory_space<vmem>>, vector<8x1xf32>,
      %cst_35 = arith.constant 0.000000e+00 : f32
      %42 = vector.broadcast %cst_35 : f32 to vector<8x1xf32>
      %c0_36 = arith.constant 0 : index
      %c0_37 = arith.constant 0 : index
      %43 = vector.load %arg8[%c0_36, %c0_37] : memref<8x1xf32, #tpu.memory_space<vmem>>, vector<8x1xf32>
      tpu.vector_store %arg8[%c0_36, %c0_37], %42 {strides = array<i32>} : memref<8x1xf32, #tpu.memory_space<vmem>>, vector<8x1xf32>,
      %cst_38 = arith.constant 0.000000e+00 : f32
      %44 = vector.broadcast %cst_38 : f32 to vector<8x1xf32>
      %c0_39 = arith.constant 0 : index
      %c0_40 = arith.constant 0 : index
      %45 = vector.load %arg9[%c0_39, %c0_40] : memref<8x1xf32, #tpu.memory_space<vmem>>, vector<8x1xf32>
      tpu.vector_store %arg9[%c0_39, %c0_40], %44 {strides = array<i32>} : memref<8x1xf32, #tpu.memory_space<vmem>>, vector<8x1xf32>,
    } else {
    }
    %c0 = arith.constant 0 : index
    %c0_4 = arith.constant 0 : index
    %8 = vector.load %arg3[%c0, %c0_4] : memref<8x32xf32, #tpu.memory_space<vmem>>, vector<8x32xf32>
    %c0_5 = arith.constant 0 : index
    %c0_6 = arith.constant 0 : index
    %9 = vector.load %arg4[%c0_5, %c0_6] : memref<8x32xf32, #tpu.memory_space<vmem>>, vector<8x32xf32>
    %c0_7 = arith.constant 0 : index
    %c0_8 = arith.constant 0 : index
    %10 = vector.load %arg6[%c0_7, %c0_8] : memref<8x1xf32, #tpu.memory_space<vmem>>, vector<8x1xf32>
    %cst = arith.constant dense<0xFF800000> : vector<8xf32>
    %11 = vector.multi_reduction <maximumf>, %8, %cst [1] : vector<8x32xf32> to vector<8xf32>
    %12 = vector.shape_cast %11 : vector<8xf32> to vector<8x1xf32>
    %13 = arith.maximumf %10, %12 : vector<8x1xf32>
    %14 = vector.broadcast %13 : vector<8x1xf32> to vector<8x32xf32>
    %15 = arith.subf %8, %14 : vector<8x32xf32>
    %16 = math.exp %15 : vector<8x32xf32>
    %cst_9 = arith.constant 1.000000e+00 : f32
    %17 = vector.broadcast %cst_9 : f32 to vector<32x1xf32>
    %cst_10 = arith.constant dense<0.000000e+00> : vector<8x1xf32>
    %18 = tpu.matmul %16, %17, %cst_10 {dimension_numbers = #tpu.dot_dimension_numbers<[1], [0], [0], [1], [0, 0, 1, 1], [], []>} : vector<8x32xf32>, vector<32x1xf32>, vector<8x1xf32> -> vector<8x1xf32>
    %cst_11 = arith.constant dense<0.000000e+00> : vector<8x1xf32>
    %19 = tpu.matmul %9, %17, %cst_11 {dimension_numbers = #tpu.dot_dimension_numbers<[1], [0], [0], [1], [0, 0, 1, 1], [], []>} : vector<8x32xf32>, vector<32x1xf32>, vector<8x1xf32> -> vector<8x1xf32>
    %20 = arith.mulf %9, %8 : vector<8x32xf32>
    %cst_12 = arith.constant dense<0.000000e+00> : vector<8x1xf32>
    %21 = tpu.matmul %20, %17, %cst_12 {dimension_numbers = #tpu.dot_dimension_numbers<[1], [0], [0], [1], [0, 0, 1, 1], [], []>} : vector<8x32xf32>, vector<32x1xf32>, vector<8x1xf32> -> vector<8x1xf32>
    %22 = arith.subf %10, %13 : vector<8x1xf32>
    %23 = math.exp %22 : vector<8x1xf32>
    %c0_13 = arith.constant 0 : index
    %c0_14 = arith.constant 0 : index
    %24 = vector.load %arg7[%c0_13, %c0_14] : memref<8x1xf32, #tpu.memory_space<vmem>>, vector<8x1xf32>
    %25 = arith.mulf %23, %24 : vector<8x1xf32>
    %26 = arith.addf %25, %18 : vector<8x1xf32>
    %c0_15 = arith.constant 0 : index
    %c0_16 = arith.constant 0 : index
    %27 = vector.load %arg7[%c0_15, %c0_16] : memref<8x1xf32, #tpu.memory_space<vmem>>, vector<8x1xf32>
    tpu.vector_store %arg7[%c0_15, %c0_16], %26 {strides = array<i32>} : memref<8x1xf32, #tpu.memory_space<vmem>>, vector<8x1xf32>,
    %c0_17 = arith.constant 0 : index
    %c0_18 = arith.constant 0 : index
    %28 = vector.load %arg8[%c0_17, %c0_18] : memref<8x1xf32, #tpu.memory_space<vmem>>, vector<8x1xf32>
    %29 = arith.addf %28, %19 : vector<8x1xf32>
    %c0_19 = arith.constant 0 : index
    %c0_20 = arith.constant 0 : index
    %30 = vector.load %arg8[%c0_19, %c0_20] : memref<8x1xf32, #tpu.memory_space<vmem>>, vector<8x1xf32>
    tpu.vector_store %arg8[%c0_19, %c0_20], %29 {strides = array<i32>} : memref<8x1xf32, #tpu.memory_space<vmem>>, vector<8x1xf32>,
    %c0_21 = arith.constant 0 : index
    %c0_22 = arith.constant 0 : index
    %31 = vector.load %arg9[%c0_21, %c0_22] : memref<8x1xf32, #tpu.memory_space<vmem>>, vector<8x1xf32>
    %32 = arith.addf %31, %21 : vector<8x1xf32>
    %c0_23 = arith.constant 0 : index
    %c0_24 = arith.constant 0 : index
    %33 = vector.load %arg9[%c0_23, %c0_24] : memref<8x1xf32, #tpu.memory_space<vmem>>, vector<8x1xf32>
    tpu.vector_store %arg9[%c0_23, %c0_24], %32 {strides = array<i32>} : memref<8x1xf32, #tpu.memory_space<vmem>>, vector<8x1xf32>,
    %c0_25 = arith.constant 0 : index
    %c0_26 = arith.constant 0 : index
    %34 = vector.load %arg6[%c0_25, %c0_26] : memref<8x1xf32, #tpu.memory_space<vmem>>, vector<8x1xf32>
    tpu.vector_store %arg6[%c0_25, %c0_26], %13 {strides = array<i32>} : memref<8x1xf32, #tpu.memory_space<vmem>>, vector<8x1xf32>,
    %c0_i32_27 = arith.constant 0 : i32
    %35 = arith.cmpi eq, %arg2, %c0_i32_27 : i32
    %36 = arith.extui %35 : i1 to i32
    %c0_i32_28 = arith.constant 0 : i32
    %37 = arith.cmpi ne, %36, %c0_i32_28 : i32
    scf.if %37 {
      %c0_29 = arith.constant 0 : index
      %c0_30 = arith.constant 0 : index
      %38 = vector.load %arg7[%c0_29, %c0_30] : memref<8x1xf32, #tpu.memory_space<vmem>>, vector<8x1xf32>
      %39 = math.log %38 : vector<8x1xf32>
      %c0_31 = arith.constant 0 : index
      %c0_32 = arith.constant 0 : index
      %40 = vector.load %arg6[%c0_31, %c0_32] : memref<8x1xf32, #tpu.memory_space<vmem>>, vector<8x1xf32>
      %41 = arith.addf %39, %40 : vector<8x1xf32>
      %c0_33 = arith.constant 0 : index
      %c0_34 = arith.constant 0 : index
      %42 = vector.load %arg8[%c0_33, %c0_34] : memref<8x1xf32, #tpu.memory_space<vmem>>, vector<8x1xf32>
      %43 = arith.mulf %41, %42 : vector<8x1xf32>
      %c0_35 = arith.constant 0 : index
      %c0_36 = arith.constant 0 : index
      %44 = vector.load %arg9[%c0_35, %c0_36] : memref<8x1xf32, #tpu.memory_space<vmem>>, vector<8x1xf32>
      %45 = arith.subf %43, %44 : vector<8x1xf32>
      %c0_37 = arith.constant 0 : index
      %c0_38 = arith.constant 0 : index
      %c0_39 = arith.constant 0 : index
      %46 = vector.load %arg5[%c0_37, %c0_38, %c0_39] : memref<1x1x1xf32, #tpu.memory_space<vmem>>, vector<1x1x1xf32>
      %47 = vector.shape_cast %45 : vector<8x1xf32> to vector<1x8x1xf32>
      %cst_40 = arith.constant dense<0.000000e+00> : vector<1xf32>
      %48 = vector.multi_reduction <add>, %47, %cst_40 [1, 2] : vector<1x8x1xf32> to vector<1xf32>
      %49 = vector.shape_cast %48 : vector<1xf32> to vector<1x1x1xf32>
      %50 = vector.extract %49[0, 0, 0] : f32 from vector<1x1x1xf32>
      %51 = vector.broadcast %50 : f32 to vector<1x1xf32>
      %52 = vector.shape_cast %51 : vector<1x1xf32> to vector<1x1x1xf32>
      %53 = arith.addf %46, %52 : vector<1x1x1xf32>
      %c0_41 = arith.constant 0 : index
      %c0_42 = arith.constant 0 : index
      %c0_43 = arith.constant 0 : index
      %54 = vector.load %arg5[%c0_41, %c0_42, %c0_43] : memref<1x1x1xf32, #tpu.memory_space<vmem>>, vector<1x1x1xf32>
      tpu.vector_store %arg5[%c0_41, %c0_42, %c0_43], %53 {strides = array<i32>} : memref<1x1x1xf32, #tpu.memory_space<vmem>>, vector<1x1x1xf32>,
    } else {
    }
    return
  }
  func.func @transform_0(%arg0: i32, %arg1: i32, %arg2: i32) -> (i32, i32) {
    %c1_i32 = arith.constant 1 : i32
    %0 = arith.muli %arg0, %c1_i32 : i32
    %1 = arith.addi %0, %arg1 : i32
    %c0_i32 = arith.constant 0 : i32
    return %1, %arg2 : i32, i32
  }
  func.func @transform_1(%arg0: i32, %arg1: i32, %arg2: i32) -> (i32, i32) {
    %c1_i32 = arith.constant 1 : i32
    %0 = arith.muli %arg0, %c1_i32 : i32
    %1 = arith.addi %0, %arg1 : i32
    %c0_i32 = arith.constant 0 : i32
    return %1, %arg2 : i32, i32
  }
  func.func @transform_2(%arg0: i32, %arg1: i32, %arg2: i32) -> (i32, i32, i32) {
    %c0_i32 = arith.constant 0 : i32
    %c0_i32_0 = arith.constant 0 : i32
    %c0_i32_1 = arith.constant 0 : i32
    return %arg0, %c0_i32, %c0_i32_0 : i32, i32, i32
  }
}

</mosaic_0001>

<llo_original>
// kernel: tpu_custom_call.1
$region0: #{tpu_custom_call.1}
  #allocation0 [shape = 'u32[]', space=smem, size = 0x4, offset = 0x4, fixed_abs, tag = 'smem constant byte address 0x4 - core index']
  #allocation1 [shape = 'u32[144,128]{1,0:T(1,128)}', space=vmem, size = 0x12000, scoped, tag = 'internal scratch']
  #allocation2 [shape = 'f32[8,1]{1,0:T(8,128)}', space=vmem, size = 0x1000, scoped, tag = 'scratch operand']
  #allocation3 [shape = 'f32[8,1]{1,0:T(8,128)}', space=vmem, size = 0x1000, scoped, tag = 'scratch operand']
  #allocation4 [shape = 'f32[8,1]{1,0:T(8,128)}', space=vmem, size = 0x1000, scoped, tag = 'scratch operand']
  #allocation5 [shape = 'f32[8,1]{1,0:T(8,128)}', space=vmem, size = 0x1000, scoped, tag = 'scratch operand']
  %s0 = inlined_call_operand.hbm [shape: f32[8,32], index: 0, kind: input, shape index: {}]
  %s1 = inlined_call_operand.hbm [shape: f32[8,32], index: 1, kind: input, shape index: {}]
  %s2 = inlined_call_operand.hbm [shape: f32[1,1,1], index: 2, kind: output, shape index: {}]
  %s3 = sld [smem:[#allocation0]]
  $region38: #{tpu_custom_call.1} parent=0
    _
  %s5 = ssub.s32 1, %s3
  %s6 = scalar_select 0, %s5, %s3
  $region1: #{tpu_custom_call.1} parent=0
    #allocation6 [shape = 'u8[4096]{0}', space=vmem, size = 0x1000, scoped, tag = 'input window, operand 0, single buffered']
    #allocation7 [shape = 's32[1]{0}', space=sflag, size = 0x4, scoped, tag = 'scoped memory for tpu_custom_call.1']
    #allocation8 [shape = 's32[1]{0}', space=sflag, size = 0x4, scoped, tag = 'scoped memory for tpu_custom_call.1']
    #allocation9 [shape = 'u8[4096]{0}', space=vmem, size = 0x1000, scoped, tag = 'input window, operand 1, single buffered']
    #allocation10 [shape = 's32[1]{0}', space=sflag, size = 0x4, scoped, tag = 'scoped memory for tpu_custom_call.1']
    #allocation11 [shape = 'u8[512]{0}', space=vmem, size = 0x400, scoped, tag = 'output window, operand 0, single buffered']
    %7 = vsyncpa [#allocation7], 0
    %8 = vsyncpa [#allocation10], 0
    %9 = vsyncpa [#allocation8], 0
    // Predicated region
    $region2: #{tpu_custom_call.1} parent=1 // pred_check
      _
    $region3: #{tpu_custom_call.1} parent=1 // pred_check_branch
      %11 = sbr.rel (0) target = $region5
    $region4: #{tpu_custom_call.1} parent=1 // pred_region
      %s12 = sadd.s32 0, 0
      %s14 = ssub.s32 128, 128
      %15 = vsyncadd [#allocation7], %s14
      %s16 = smul.addr %s12, 128
      %s17 = scalar_lea.hbm %s0, %s16
      %s19 = sshll.u32 [#allocation6], 4
      %s20 = int_to_ptr.vmem [resolvable:$true] %s19
      %22 = dma.hbm_to_vmem [thread:$0]  %s17, 128, %s20, [#allocation7]
    $region5: #{tpu_custom_call.1} parent=1 // pred_fallthru
      _
    // Predicated region
    $region6: #{tpu_custom_call.1} parent=1 // pred_check
      _
    $region7: #{tpu_custom_call.1} parent=1 // pred_check_branch
      %24 = sbr.rel (0) target = $region9
    $region8: #{tpu_custom_call.1} parent=1 // pred_region
      %s25 = sadd.s32 0, 0
      %s27 = ssub.s32 128, 128
      %28 = vsyncadd [#allocation10], %s27
      %s29 = smul.addr %s25, 128
      %s30 = scalar_lea.hbm %s1, %s29
      %s32 = sshll.u32 [#allocation9], 4
      %s33 = int_to_ptr.vmem [resolvable:$true] %s32
      %35 = dma.hbm_to_vmem [thread:$0]  %s30, 128, %s33, [#allocation10]
    $region9: #{tpu_custom_call.1} parent=1 // pred_fallthru
      _
    // Predicated region
    $region10: #{tpu_custom_call.1} parent=1 // pred_check
      _
    $region11: #{tpu_custom_call.1} parent=1 // pred_check_branch
      %37 = sbr.rel (0) target = $region13
    $region12: #{tpu_custom_call.1} parent=1 // pred_region
      %38 = dma.done [#allocation7], 128
    $region13: #{tpu_custom_call.1} parent=1 // pred_fallthru
      _
    // Predicated region
    $region14: #{tpu_custom_call.1} parent=1 // pred_check
      _
    $region15: #{tpu_custom_call.1} parent=1 // pred_check_branch
      %40 = sbr.rel (0) target = $region17
    $region16: #{tpu_custom_call.1} parent=1 // pred_region
      %41 = dma.done [#allocation10], 128
    $region17: #{tpu_custom_call.1} parent=1 // pred_fallthru
      _
    %s42 = sadd.s32 0, 0
    %s43 = sadd.s32 0, 0
    %p44 = scmp.eq.s32.totalorder 0, 0
    %p45 = scmp.eq.s32.totalorder 0, 0
    %p46 = pnand %p44, %p45
    %p47 = pneg %p46
    // Predicated region
    $region18: #{tpu_custom_call.1} parent=1 // pred_check
      _
    $region19: #{tpu_custom_call.1} parent=1 // pred_check_branch
      %49 = sbr.rel (%p46) target = $region21
    $region20: #{tpu_custom_call.1} parent=1 // pred_region
      %vm50 = vcmask 0
      %51 = vst.msk [vmem:[#allocation11] sm:$0x1] %vm50, 0.0
    $region21: #{tpu_custom_call.1} parent=1 // pred_fallthru
      _
    // Predicated region
    $region22: #{tpu_custom_call.1} parent=1 // pred_check
      %p52 = pneg %p45
    $region23: #{tpu_custom_call.1} parent=1 // pred_check_branch
      %54 = sbr.rel (%p52) target = $region25
    $region24: #{tpu_custom_call.1} parent=1 // pred_region
      %vm55 = vcmask 7168
      %56 = vst.msk [vmem:[#allocation2] sm:$0xff] %vm55, -3.4028235e+38
      %57 = vst.msk [vmem:[#allocation3] sm:$0xff] %vm55, 0.0
      %58 = vst.msk [vmem:[#allocation4] sm:$0xff] %vm55, 0.0
      %59 = vst.msk [vmem:[#allocation5] sm:$0xff] %vm55, 0.0
    $region25: #{tpu_custom_call.1} parent=1 // pred_fallthru
      _
    %v60 = vld [vmem:[#allocation6] sm:$0xff]
    %v61 = vld [vmem:[#allocation9] sm:$0xff]
    %v62 = vld [vmem:[#allocation2] sm:$0xff]
    %vm63 = vcmask 261120
    %v64 = vsel %vm63, %v60, -inf
    %65 = vmax.xlane.f32.xlu0 %v64
    %v66 = vpop.xlane.xlu0 %65
    %v67 = vmax.f32 %v62, %v66
    %69 = vset.pattern.permute.xlu0 0
    %70 = vperm.xlu0 %69, %v67
    %v71 = vpop.permute.xlu0 %70
    %v73 = vsub.f32 %v60, %v71
    %v74 = vmul.f32 %v73, 1.442695
    %v75 = vpow.pop %v74
    %v77 = vsel %vm63, %v75, 0
    %79 = vmatprep.subr.mxu0 0.0
    %80 = vmatpush1.msra.mxu0 1.0
    %81 = vmatprep.subr.mxu0 0.0
    %82 = vmatpush1.msra.mxu0 1.0
    %83 = vmatprep.subr.mxu0 0.0
    %84 = vmatpush1.msra.mxu0 1.0
    %85 = vmatprep.subr.mxu0 0.0
    %86 = vmatpush1.msra.mxu0 1.0
    %87 = vmatprep.subr.mxu0 0.0
    %88 = vmatpush1.msra.mxu0 0.0
    %89 = vmatprep.subr.mxu0 0.0
    %90 = vmatpush1.msra.mxu0 0.0
    %91 = vmatprep.subr.mxu0 0.0
    %92 = vmatpush1.msra.mxu0 0.0
    %93 = vmatprep.subr.mxu0 0.0
    %94 = vmatpush1.msra.mxu0 0.0
    %95 = vmatprep.subr.mxu0 0.0
    %96 = vmatpush1.msra.mxu0 0.0
    %97 = vmatprep.subr.mxu0 0.0
    %98 = vmatpush1.msra.mxu0 0.0
    %99 = vmatprep.subr.mxu0 0.0
    %100 = vmatpush1.msra.mxu0 0.0
    %101 = vmatprep.subr.mxu0 0.0
    %102 = vmatpush1.msra.mxu0 0.0
    %103 = vmatprep.subr.mxu0 0.0
    %104 = vmatpush1.msra.mxu0 0.0
    %105 = vmatprep.subr.mxu0 0.0
    %106 = vmatpush1.msra.mxu0 0.0
    %107 = vmatprep.subr.mxu0 0.0
    %108 = vmatpush1.msra.mxu0 0.0
    %109 = vmatprep.subr.mxu0 0.0
    %110 = vmatpush1.msra.mxu0 0.0
    %111 = vmatprep.subr.mxu0 0.0
    %112 = vmatpush1.msra.mxu0 0.0
    %113 = vmatprep.subr.mxu0 0.0
    %114 = vmatpush1.msra.mxu0 0.0
    %115 = vmatprep.subr.mxu0 0.0
    %116 = vmatpush1.msra.mxu0 0.0
    %117 = vmatprep.subr.mxu0 0.0
    %118 = vmatpush1.msra.mxu0 0.0
    %119 = vmatprep.subr.mxu0 0.0
    %120 = vmatpush1.msra.mxu0 0.0
    %121 = vmatprep.subr.mxu0 0.0
    %122 = vmatpush1.msra.mxu0 0.0
    %123 = vmatprep.subr.mxu0 0.0
    %124 = vmatpush1.msra.mxu0 0.0
    %125 = vmatprep.subr.mxu0 0.0
    %126 = vmatpush1.msra.mxu0 0.0
    %127 = vmatprep.subr.mxu0 0.0
    %128 = vmatpush1.msra.mxu0 0.0
    %129 = vmatprep.subr.mxu0 0.0
    %130 = vmatpush1.msra.mxu0 0.0
    %131 = vmatprep.subr.mxu0 0.0
    %132 = vmatpush1.msra.mxu0 0.0
    %133 = vmatprep.subr.mxu0 0.0
    %134 = vmatpush1.msra.mxu0 0.0
    %135 = vmatprep.subr.mxu0 0.0
    %136 = vmatpush1.msra.mxu0 0.0
    %137 = vmatprep.subr.mxu0 0.0
    %138 = vmatpush1.msra.mxu0 0.0
    %139 = vmatprep.subr.mxu0 0.0
    %140 = vmatpush1.msra.mxu0 0.0
    %141 = vmatprep.subr.mxu0 0.0
    %142 = vmatpush1.msra.mxu0 0.0
    %143 = vmatprep.mubr.f32.mxu0 0.0
    %144 = vmatmul.mubr.f32.gmra.mrb[0].mxu0 %v77
    %v145 = vpop.f32.mrb[0].mxu0
    %v146 = vadd.f32 0.0, %v145
    %v147 = vpop.f32.mrb[0].mxu0
    %148 = vdwg.mxu0
    %v150 = vsel %vm63, %v61, 0
    %152 = vmatprep.subr.mxu0 0.0
    %153 = vmatpush1.msra.mxu0 1.0
    %154 = vmatprep.subr.mxu0 0.0
    %155 = vmatpush1.msra.mxu0 1.0
    %156 = vmatprep.subr.mxu0 0.0
    %157 = vmatpush1.msra.mxu0 1.0
    %158 = vmatprep.subr.mxu0 0.0
    %159 = vmatpush1.msra.mxu0 1.0
    %160 = vmatprep.subr.mxu0 0.0
    %161 = vmatpush1.msra.mxu0 0.0
    %162 = vmatprep.subr.mxu0 0.0
    %163 = vmatpush1.msra.mxu0 0.0
    %164 = vmatprep.subr.mxu0 0.0
    %165 = vmatpush1.msra.mxu0 0.0
    %166 = vmatprep.subr.mxu0 0.0
    %167 = vmatpush1.msra.mxu0 0.0
    %168 = vmatprep.subr.mxu0 0.0
    %169 = vmatpush1.msra.mxu0 0.0
    %170 = vmatprep.subr.mxu0 0.0
    %171 = vmatpush1.msra.mxu0 0.0
    %172 = vmatprep.subr.mxu0 0.0
    %173 = vmatpush1.msra.mxu0 0.0
    %174 = vmatprep.subr.mxu0 0.0
    %175 = vmatpush1.msra.mxu0 0.0
    %176 = vmatprep.subr.mxu0 0.0
    %177 = vmatpush1.msra.mxu0 0.0
    %178 = vmatprep.subr.mxu0 0.0
    %179 = vmatpush1.msra.mxu0 0.0
    %180 = vmatprep.subr.mxu0 0.0
    %181 = vmatpush1.msra.mxu0 0.0
    %182 = vmatprep.subr.mxu0 0.0
    %183 = vmatpush1.msra.mxu0 0.0
    %184 = vmatprep.subr.mxu0 0.0
    %185 = vmatpush1.msra.mxu0 0.0
    %186 = vmatprep.subr.mxu0 0.0
    %187 = vmatpush1.msra.mxu0 0.0
    %188 = vmatprep.subr.mxu0 0.0
    %189 = vmatpush1.msra.mxu0 0.0
    %190 = vmatprep.subr.mxu0 0.0
    %191 = vmatpush1.msra.mxu0 0.0
    %192 = vmatprep.subr.mxu0 0.0
    %193 = vmatpush1.msra.mxu0 0.0
    %194 = vmatprep.subr.mxu0 0.0
    %195 = vmatpush1.msra.mxu0 0.0
    %196 = vmatprep.subr.mxu0 0.0
    %197 = vmatpush1.msra.mxu0 0.0
    %198 = vmatprep.subr.mxu0 0.0
    %199 = vmatpush1.msra.mxu0 0.0
    %200 = vmatprep.subr.mxu0 0.0
    %201 = vmatpush1.msra.mxu0 0.0
    %202 = vmatprep.subr.mxu0 0.0
    %203 = vmatpush1.msra.mxu0 0.0
    %204 = vmatprep.subr.mxu0 0.0
    %205 = vmatpush1.msra.mxu0 0.0
    %206 = vmatprep.subr.mxu0 0.0
    %207 = vmatpush1.msra.mxu0 0.0
    %208 = vmatprep.subr.mxu0 0.0
    %209 = vmatpush1.msra.mxu0 0.0
    %210 = vmatprep.subr.mxu0 0.0
    %211 = vmatpush1.msra.mxu0 0.0
    %212 = vmatprep.subr.mxu0 0.0
    %213 = vmatpush1.msra.mxu0 0.0
    %214 = vmatprep.subr.mxu0 0.0
    %215 = vmatpush1.msra.mxu0 0.0
    %216 = vmatprep.mubr.f32.mxu0 0.0
    %217 = vmatmul.mubr.f32.gmra.mrb[0].mxu0 %v150
    %v218 = vpop.f32.mrb[0].mxu0
    %v219 = vadd.f32 0.0, %v218
    %v220 = vpop.f32.mrb[0].mxu0
    %221 = vdwg.mxu0
    %v222 = vmul.f32 %v61, %v60
    %v224 = vsel %vm63, %v222, 0
    %226 = vmatprep.subr.mxu0 0.0
    %227 = vmatpush1.msra.mxu0 1.0
    %228 = vmatprep.subr.mxu0 0.0
    %229 = vmatpush1.msra.mxu0 1.0
    %230 = vmatprep.subr.mxu0 0.0
    %231 = vmatpush1.msra.mxu0 1.0
    %232 = vmatprep.subr.mxu0 0.0
    %233 = vmatpush1.msra.mxu0 1.0
    %234 = vmatprep.subr.mxu0 0.0
    %235 = vmatpush1.msra.mxu0 0.0
    %236 = vmatprep.subr.mxu0 0.0
    %237 = vmatpush1.msra.mxu0 0.0
    %238 = vmatprep.subr.mxu0 0.0
    %239 = vmatpush1.msra.mxu0 0.0
    %240 = vmatprep.subr.mxu0 0.0
    %241 = vmatpush1.msra.mxu0 0.0
    %242 = vmatprep.subr.mxu0 0.0
    %243 = vmatpush1.msra.mxu0 0.0
    %244 = vmatprep.subr.mxu0 0.0
    %245 = vmatpush1.msra.mxu0 0.0
    %246 = vmatprep.subr.mxu0 0.0
    %247 = vmatpush1.msra.mxu0 0.0
    %248 = vmatprep.subr.mxu0 0.0
    %249 = vmatpush1.msra.mxu0 0.0
    %250 = vmatprep.subr.mxu0 0.0
    %251 = vmatpush1.msra.mxu0 0.0
    %252 = vmatprep.subr.mxu0 0.0
    %253 = vmatpush1.msra.mxu0 0.0
    %254 = vmatprep.subr.mxu0 0.0
    %255 = vmatpush1.msra.mxu0 0.0
    %256 = vmatprep.subr.mxu0 0.0
    %257 = vmatpush1.msra.mxu0 0.0
    %258 = vmatprep.subr.mxu0 0.0
    %259 = vmatpush1.msra.mxu0 0.0
    %260 = vmatprep.subr.mxu0 0.0
    %261 = vmatpush1.msra.mxu0 0.0
    %262 = vmatprep.subr.mxu0 0.0
    %263 = vmatpush1.msra.mxu0 0.0
    %264 = vmatprep.subr.mxu0 0.0
    %265 = vmatpush1.msra.mxu0 0.0
    %266 = vmatprep.subr.mxu0 0.0
    %267 = vmatpush1.msra.mxu0 0.0
    %268 = vmatprep.subr.mxu0 0.0
    %269 = vmatpush1.msra.mxu0 0.0
    %270 = vmatprep.subr.mxu0 0.0
    %271 = vmatpush1.msra.mxu0 0.0
    %272 = vmatprep.subr.mxu0 0.0
    %273 = vmatpush1.msra.mxu0 0.0
    %274 = vmatprep.subr.mxu0 0.0
    %275 = vmatpush1.msra.mxu0 0.0
    %276 = vmatprep.subr.mxu0 0.0
    %277 = vmatpush1.msra.mxu0 0.0
    %278 = vmatprep.subr.mxu0 0.0
    %279 = vmatpush1.msra.mxu0 0.0
    %280 = vmatprep.subr.mxu0 0.0
    %281 = vmatpush1.msra.mxu0 0.0
    %282 = vmatprep.subr.mxu0 0.0
    %283 = vmatpush1.msra.mxu0 0.0
    %284 = vmatprep.subr.mxu0 0.0
    %285 = vmatpush1.msra.mxu0 0.0
    %286 = vmatprep.subr.mxu0 0.0
    %287 = vmatpush1.msra.mxu0 0.0
    %288 = vmatprep.subr.mxu0 0.0
    %289 = vmatpush1.msra.mxu0 0.0
    %290 = vmatprep.mubr.f32.mxu0 0.0
    %291 = vmatmul.mubr.f32.gmra.mrb[0].mxu0 %v224
    %v292 = vpop.f32.mrb[0].mxu0
    %v293 = vadd.f32 0.0, %v292
    %v294 = vpop.f32.mrb[0].mxu0
    %295 = vdwg.mxu0
    %v296 = vsub.f32 %v62, %v67
    %v297 = vmul.f32 %v296, 1.442695
    %v298 = vpow.pop %v297
    %v299 = vld [vmem:[#allocation3] sm:$0xff]
    %v300 = vmul.f32 %v298, %v299
    %v301 = vadd.f32 %v300, %v146
    %vm302 = vcmask 7168
    %303 = vst.msk [vmem:[#allocation3] sm:$0xff] %vm302, %v301
    %v304 = vld [vmem:[#allocation4] sm:$0xff]
    %v305 = vadd.f32 %v304, %v219
    %306 = vst.msk [vmem:[#allocation4] sm:$0xff] %vm302, %v305
    %v307 = vld [vmem:[#allocation5] sm:$0xff]
    %v308 = vadd.f32 %v307, %v293
    %309 = vst.msk [vmem:[#allocation5] sm:$0xff] %vm302, %v308
    %310 = vst.msk [vmem:[#allocation2] sm:$0xff] %vm302, %v67
    // Predicated region
    $region26: #{tpu_custom_call.1} parent=1 // pred_check
      %p311 = pneg %p45
    $region27: #{tpu_custom_call.1} parent=1 // pred_check_branch
      %313 = sbr.rel (%p311) target = $region29
    $region28: #{tpu_custom_call.1} parent=1 // pred_region
      %v314 = vld [vmem:[#allocation3] sm:$0xff]
      %v315 = vlog2.pop %v314
      %v316 = vmul.f32 %v315, 0.6931472
      %v317 = vld [vmem:[#allocation2] sm:$0xff]
      %v318 = vadd.f32 %v316, %v317
      %v319 = vld [vmem:[#allocation4] sm:$0xff]
      %v320 = vmul.f32 %v318, %v319
      %v321 = vld [vmem:[#allocation5] sm:$0xff]
      %v322 = vsub.f32 %v320, %v321
      %v323 = vld [vmem:[#allocation11] sm:$0x1]
      %v324 = vsel %vm302, %v322, 0.0
      %325 = vadd.xlane.f32.xlu0 %v324
      %v326 = vpop.xlane.xlu0 %325
      %v327 = vrot.slane %v326, 4
      %v328 = vadd.f32 %v326, %v327
      %v329 = vrot.slane %v328, 2
      %v330 = vadd.f32 %v328, %v329
      %v331 = vrot.slane %v330, 1
      %v332 = vadd.f32 %v330, %v331
      %s333 = vtos %v332
      %v334 = vstv %s333
      %v335 = vadd.f32 %v323, %v334
      %vm336 = vcmask 0
      %337 = vst.msk [vmem:[#allocation11] sm:$0x1] %vm336, %v335
    $region29: #{tpu_custom_call.1} parent=1 // pred_fallthru
      _
    // Predicated region
    $region30: #{tpu_custom_call.1} parent=1 // pred_check
      _
    $region31: #{tpu_custom_call.1} parent=1 // pred_check_branch
      %339 = sbr.rel (0) target = $region33
    $region32: #{tpu_custom_call.1} parent=1 // pred_region
      %s341 = ssub.s32 16, 16
      %342 = vsyncadd [#allocation8], %s341
      %s344 = sshll.u32 [#allocation11], 4
      %s345 = int_to_ptr.vmem [resolvable:$true] %s344
      %347 = dma.vmem_to_hbm [thread:$0]  %s345, 16, %s2, [#allocation8]
    $region33: #{tpu_custom_call.1} parent=1 // pred_fallthru
      _
    // Predicated region
    $region34: #{tpu_custom_call.1} parent=1 // pred_check
      _
    $region35: #{tpu_custom_call.1} parent=1 // pred_check_branch
      %349 = sbr.rel (0) target = $region37
    $region36: #{tpu_custom_call.1} parent=1 // pred_region
      %350 = dma.done [#allocation8], 16
    $region37: #{tpu_custom_call.1} parent=1 // pred_fallthru
      _
    %351 = vsyncpa [#allocation7], 1
    %352 = vsyncpa [#allocation10], 1
    %353 = vsyncpa [#allocation8], 1

</llo_original>
